<compile_context>
chip_gen: v7x
topology: tpu7x:2x2x1
jax: 0.10.0
libtpu: 0.0.40
codegen_flags: <defaults>
</compile_context>

<pallas_src>
import functools

import jax
import jax.numpy as jnp
from jax.experimental import pallas as pl
from jax.experimental.pallas import tpu as pltpu


NEG_SLOPE = 0.01   # torch.nn.LeakyReLU default negative_slope
LANE = 128         # every layer's N is padded to a multiple of this
# NOTE: on v6e/v7x (256x256 MXU) 256-wide layers fill the MXU better; only
# worth changing if the model config itself can move to 256-multiples.


def _round_up(n, m):
    return ((n + m - 1) // m) * m


def _fused_mlp_kernel(x_ref, *rest, n_layers, acts, compute_dtype):
    """rest = (w0, b0, w1, b1, ..., w_{L-1}, b_{L-1}, o_ref).

    x_ref : (tm, K0)    f32   (K0 = natural in_size; cast to bf16 in-kernel)
    w_l   : (Klp, Nlp)  bf16  (pre-transposed torch weight, lane-padded N)
    b_l   : (1, Nlp)    f32
    o_ref : (tm, NLp)   out_dtype
    """
    o_ref = rest[-1]
    h = x_ref[...]
    for l in range(n_layers):
        w_ref = rest[2 * l]
        b_ref = rest[2 * l + 1]
        # bf16 x bf16 -> f32 accumulate on the MXU.
        y = jnp.dot(h.astype(w_ref.dtype), w_ref[...],
                    preferred_element_type=jnp.float32)
        y = y + b_ref[...]                       # f32 bias add (VPU)
        if acts[l]:
            y = jnp.maximum(y, NEG_SLOPE * y)    # LeakyReLU: one vmul + vmax
        # Downcast carried activation (halves live footprint / spill traffic
        # for wide layers); keep the final layer in f32 for the output store.
        h = y.astype(compute_dtype) if l < n_layers - 1 else y
    o_ref[...] = h.astype(o_ref.dtype)


def prepare_params(params, compute_dtype=jnp.bfloat16):
    """Pad/cast the weights ONCE (weights are constants; don't redo per call).

    params: list of (w_t, b) with w_t of shape (in, out) (torch weight
    transposed) and b of shape (out,).
    """
    real_sizes = [params[0][0].shape[0]] + [w_t.shape[1] for (w_t, _) in params]
    # Layer-0 K stays at its natural size (so x needs no lane padding);
    # every N (and hence every later K) is padded to a multiple of 128.
    padded = [real_sizes[0]] + [_round_up(s, LANE) for s in real_sizes[1:]]
    w_ps, b_ps = [], []
    for l, (w_t, b) in enumerate(params):
        kp, np_ = padded[l], padded[l + 1]
        w_ps.append(jnp.pad(w_t, ((0, kp - w_t.shape[0]),
                                  (0, np_ - w_t.shape[1]))).astype(compute_dtype))
        b_ps.append(jnp.pad(b.reshape(1, -1),
                            ((0, 0), (0, np_ - b.shape[0]))).astype(jnp.float32))
    return dict(w=w_ps, b=b_ps, real_sizes=real_sizes, padded=padded,
                compute_dtype=compute_dtype)


def fully_connect_nn_forward(x, prepared, out_size, final_layer_act=True,
                             out_dtype=jnp.float32):
    """Fused forward. x: (..., in_size) f32 -> (-1, out_size) out_dtype."""
    w_ps, b_ps = prepared["w"], prepared["b"]
    padded = prepared["padded"]
    compute_dtype = prepared["compute_dtype"]
    in_size = prepared["real_sizes"][0]
    n_layers = len(w_ps)
    assert prepared["real_sizes"][-1] == out_size

    x2 = x.reshape(-1, in_size)        # torch Linear acts on the last dim
    M = x2.shape[0]

    # Rows: round up to a multiple of 16 only (bf16 sublane packing is
    # [16,128]); the tail tile is handled by the cdiv grid, not full-tile pad.
    M_pad = _round_up(M, 16)
    if M_pad != M:
        x2 = jnp.pad(x2, ((0, M_pad - M), (0, 0)))

    tm = min(512, M_pad)
    if M_pad >= 512:
        # Ensure >=2 grid steps so v7x's two TensorCores both get work.
        tm = min(tm, _round_up(-(-M_pad // 2), 16))
    grid_m = pl.cdiv(M_pad, tm)

    acts = tuple((l < n_layers - 1) or final_layer_act for l in range(n_layers))
    kernel = functools.partial(_fused_mlp_kernel, n_layers=n_layers, acts=acts,
                               compute_dtype=compute_dtype)

    # Weights/biases have constant index maps (DMA'd once). Single-buffer them
    # when large enough that the default double-buffered copy threatens v7x's
    # 64 MiB VMEM; tiny configs keep the default (validated) path.
    w_bytes = sum(int(w.size) * w.dtype.itemsize for w in w_ps)
    b_bytes = sum(int(b.size) * b.dtype.itemsize for b in b_ps)
    single_buffer = (w_bytes + b_bytes) > (1 << 20) and hasattr(pl, "Buffered")

    def const_spec(shape):
        if single_buffer:
            return pl.BlockSpec(shape, lambda i: (0, 0),
                                pipeline_mode=pl.Buffered(1))
        return pl.BlockSpec(shape, lambda i: (0, 0))

    in_specs = [pl.BlockSpec((tm, padded[0]), lambda i: (i, 0))]
    flat_inputs = [x2]
    for l in range(n_layers):
        kp, np_ = padded[l], padded[l + 1]
        in_specs.append(const_spec((kp, np_)))
        in_specs.append(const_spec((1, np_)))
        flat_inputs.append(w_ps[l])
        flat_inputs.append(b_ps[l])

    out_isz = jnp.dtype(out_dtype).itemsize
    # VMEM budget: double-buffered x/out tiles + weights (1 or 2 buffers) +
    # live intermediates.  TODO(synk): configs needing >~48 MiB should add a
    # K/N tiling grid axis for v7x instead of relying on a bigger limit.
    act_bytes = tm * max(padded[1:]) * (4 + jnp.dtype(compute_dtype).itemsize)
    needed = (2 * tm * padded[0] * x2.dtype.itemsize
              + 2 * tm * padded[-1] * out_isz
              + (1 if single_buffer else 2) * (w_bytes + b_bytes)
              + act_bytes)
    vmem_limit = int(min(max(2 * needed, 32 << 20), 96 << 20))

    flops = 2 * M_pad * sum(padded[l] * padded[l + 1] for l in range(n_layers))
    bytes_accessed = (int(x2.size) * x2.dtype.itemsize + w_bytes + b_bytes
                      + M_pad * padded[-1] * out_isz)
    cost = pl.CostEstimate(flops=int(flops), transcendentals=0,
                           bytes_accessed=int(bytes_accessed))

    out_p = pl.pallas_call(
        kernel,
        out_shape=jax.ShapeDtypeStruct((M_pad, padded[-1]), out_dtype),
        grid_spec=pltpu.PrefetchScalarGridSpec(
            num_scalar_prefetch=0,
            grid=(grid_m,),
            in_specs=in_specs,
            out_specs=pl.BlockSpec((tm, padded[-1]), lambda i: (i, 0)),
        ),
        compiler_params=pltpu.CompilerParams(
            dimension_semantics=(pltpu.PARALLEL,),
            vmem_limit_bytes=vmem_limit),
        cost_estimate=cost,
    )(*flat_inputs)

    # Strip row/lane padding; matches .view((-1, out_size)).
    return out_p[:M, :out_size].reshape(-1, out_size)


def init_params(key, in_size, n_hids, out_size, bias=True):
    """Deterministic init mimicking torch.nn.Linear (uniform +/- 1/sqrt(fan_in))."""
    sizes = [in_size] + list(n_hids) + [out_size]
    params = []
    for j in range(len(sizes) - 1):
        fan_in, fan_out = sizes[j], sizes[j + 1]
        key, kw, kb = jax.random.split(key, 3)
        bound = 1.0 / (fan_in ** 0.5)
        # torch weight is (out, in); store transposed (in, out) for the kernel.
        w_t = jax.random.uniform(kw, (fan_in, fan_out), jnp.float32,
                                 minval=-bound, maxval=bound)
        if bias:
            b = jax.random.uniform(kb, (fan_out,), jnp.float32,
                                   minval=-bound, maxval=bound)
        else:
            b = jnp.zeros((fan_out,), jnp.float32)
        params.append((w_t, b))
    return params


def _reference_forward(x, params, out_size, final_layer_act=True,
                       compute_dtype=jnp.bfloat16):
    """Pure-JAX reference using the same bf16-operand / f32-accumulate math."""
    h = x.reshape(-1, params[0][0].shape[0])
    n_layers = len(params)
    for j, (w_t, b) in enumerate(params):
        y = jnp.dot(h.astype(compute_dtype), w_t.astype(compute_dtype),
                    preferred_element_type=jnp.float32) + b
        if (j < n_layers - 1) or final_layer_act:
            y = jnp.where(y >= 0, y, NEG_SLOPE * y)
        h = y
    return h.reshape(-1, out_size)


if __name__ == "__main__":
    # FullyConnectNN(in_size=32, n_hids=[64, 128], out_size=32, grp_size=8)
    in_size = 32
    n_hids = [64, 128]
    out_size = 32
    grp_size = 8
    assert out_size % grp_size == 0   # bins = out_size // grp_size (unused in fwd)
    batch = 8

    key = jax.random.PRNGKey(0)
    key, kx = jax.random.split(key)
    x = jax.random.normal(kx, (batch, in_size), jnp.float32)
    params = init_params(key, in_size, n_hids, out_size, bias=True)

    prepared = prepare_params(params)   # pad/cast weights ONCE (cached)
    out = fully_connect_nn_forward(x, prepared, out_size, final_layer_act=True)
    out = jax.block_until_ready(out)

    ref = _reference_forward(x, params, out_size, final_layer_act=True)
    assert out.shape == (batch, out_size)
    assert jnp.allclose(out, ref, atol=1e-3, rtol=1e-3), \
        float(jnp.max(jnp.abs(out - ref)))

    # Sanity vs. full-f32 math (looser tolerance due to bf16 MXU operands).
    ref_f32 = _reference_forward(x, params, out_size, final_layer_act=True,
                                 compute_dtype=jnp.float32)
    assert jnp.allclose(out, ref_f32, atol=5e-2, rtol=5e-2)

    print("KERNEL_OK")
</pallas_src>

<mosaic_0001>
module attributes {stable_mosaic.version = 11 : i64} {
  func.func @_fused_mlp_kernel(%arg0: i32, %arg1: memref<16x32xf32, #tpu.memory_space<vmem>>, %arg2: memref<32x128xbf16, #tpu.memory_space<vmem>>, %arg3: memref<1x128xf32, #tpu.memory_space<vmem>>, %arg4: memref<128x128xbf16, #tpu.memory_space<vmem>>, %arg5: memref<1x128xf32, #tpu.memory_space<vmem>>, %arg6: memref<128x128xbf16, #tpu.memory_space<vmem>>, %arg7: memref<1x128xf32, #tpu.memory_space<vmem>>, %arg8: memref<16x128xf32, #tpu.memory_space<vmem>>) attributes {dimension_semantics = [#tpu.dimension_semantics<parallel>], iteration_bounds = array<i64: 1>, scalar_prefetch = 0 : i64, scratch_operands = 0 : i64, tpu.core_type = #tpu.core_type<tc>, window_params = [{transform_indices = @transform_0, window_bounds = array<i64: 16, 32>}, {pipeline_mode = #tpu.pipeline_mode<synchronous>, transform_indices = @transform_1, window_bounds = array<i64: 32, 128>}, {pipeline_mode = #tpu.pipeline_mode<synchronous>, transform_indices = @transform_2, window_bounds = array<i64: 1, 128>}, {pipeline_mode = #tpu.pipeline_mode<synchronous>, transform_indices = @transform_3, window_bounds = array<i64: 128, 128>}, {pipeline_mode = #tpu.pipeline_mode<synchronous>, transform_indices = @transform_4, window_bounds = array<i64: 1, 128>}, {pipeline_mode = #tpu.pipeline_mode<synchronous>, transform_indices = @transform_5, window_bounds = array<i64: 128, 128>}, {pipeline_mode = #tpu.pipeline_mode<synchronous>, transform_indices = @transform_6, window_bounds = array<i64: 1, 128>}, {transform_indices = @transform_7, window_bounds = array<i64: 16, 128>}]} {
    %c0 = arith.constant 0 : index
    %c0_0 = arith.constant 0 : index
    %0 = vector.load %arg1[%c0, %c0_0] : memref<16x32xf32, #tpu.memory_space<vmem>>, vector<16x32xf32>
    %1 = arith.truncf %0 : vector<16x32xf32> to vector<16x32xbf16>
    %c0_1 = arith.constant 0 : index
    %c0_2 = arith.constant 0 : index
    %2 = vector.load %arg2[%c0_1, %c0_2] : memref<32x128xbf16, #tpu.memory_space<vmem>>, vector<32x128xbf16>
    %cst = arith.constant dense<0.000000e+00> : vector<16x128xf32>
    %3 = tpu.matmul %1, %2, %cst {dimension_numbers = #tpu.dot_dimension_numbers<[1], [0], [0], [1], [0, 0, 1, 1], [], []>} : vector<16x32xbf16>, vector<32x128xbf16>, vector<16x128xf32> -> vector<16x128xf32>
    %c0_3 = arith.constant 0 : index
    %c0_4 = arith.constant 0 : index
    %4 = vector.load %arg3[%c0_3, %c0_4] : memref<1x128xf32, #tpu.memory_space<vmem>>, vector<1x128xf32>
    %5 = vector.broadcast %4 : vector<1x128xf32> to vector<16x128xf32>
    %6 = arith.addf %3, %5 : vector<16x128xf32>
    %cst_5 = arith.constant 0.00999999977 : f32
    %7 = vector.broadcast %cst_5 : f32 to vector<16x128xf32>
    %8 = arith.mulf %7, %6 : vector<16x128xf32>
    %9 = arith.maximumf %6, %8 : vector<16x128xf32>
    %10 = arith.truncf %9 : vector<16x128xf32> to vector<16x128xbf16>
    %c0_6 = arith.constant 0 : index
    %c0_7 = arith.constant 0 : index
    %11 = vector.load %arg4[%c0_6, %c0_7] : memref<128x128xbf16, #tpu.memory_space<vmem>>, vector<128x128xbf16>
    %cst_8 = arith.constant dense<0.000000e+00> : vector<16x128xf32>
    %12 = tpu.matmul %10, %11, %cst_8 {dimension_numbers = #tpu.dot_dimension_numbers<[1], [0], [0], [1], [0, 0, 1, 1], [], []>} : vector<16x128xbf16>, vector<128x128xbf16>, vector<16x128xf32> -> vector<16x128xf32>
    %c0_9 = arith.constant 0 : index
    %c0_10 = arith.constant 0 : index
    %13 = vector.load %arg5[%c0_9, %c0_10] : memref<1x128xf32, #tpu.memory_space<vmem>>, vector<1x128xf32>
    %14 = vector.broadcast %13 : vector<1x128xf32> to vector<16x128xf32>
    %15 = arith.addf %12, %14 : vector<16x128xf32>
    %cst_11 = arith.constant 0.00999999977 : f32
    %16 = vector.broadcast %cst_11 : f32 to vector<16x128xf32>
    %17 = arith.mulf %16, %15 : vector<16x128xf32>
    %18 = arith.maximumf %15, %17 : vector<16x128xf32>
    %19 = arith.truncf %18 : vector<16x128xf32> to vector<16x128xbf16>
    %c0_12 = arith.constant 0 : index
    %c0_13 = arith.constant 0 : index
    %20 = vector.load %arg6[%c0_12, %c0_13] : memref<128x128xbf16, #tpu.memory_space<vmem>>, vector<128x128xbf16>
    %cst_14 = arith.constant dense<0.000000e+00> : vector<16x128xf32>
    %21 = tpu.matmul %19, %20, %cst_14 {dimension_numbers = #tpu.dot_dimension_numbers<[1], [0], [0], [1], [0, 0, 1, 1], [], []>} : vector<16x128xbf16>, vector<128x128xbf16>, vector<16x128xf32> -> vector<16x128xf32>
    %c0_15 = arith.constant 0 : index
    %c0_16 = arith.constant 0 : index
    %22 = vector.load %arg7[%c0_15, %c0_16] : memref<1x128xf32, #tpu.memory_space<vmem>>, vector<1x128xf32>
    %23 = vector.broadcast %22 : vector<1x128xf32> to vector<16x128xf32>
    %24 = arith.addf %21, %23 : vector<16x128xf32>
    %cst_17 = arith.constant 0.00999999977 : f32
    %25 = vector.broadcast %cst_17 : f32 to vector<16x128xf32>
    %26 = arith.mulf %25, %24 : vector<16x128xf32>
    %27 = arith.maximumf %24, %26 : vector<16x128xf32>
    %c0_18 = arith.constant 0 : index
    %c0_19 = arith.constant 0 : index
    %28 = vector.load %arg8[%c0_18, %c0_19] : memref<16x128xf32, #tpu.memory_space<vmem>>, vector<16x128xf32>
    tpu.vector_store %arg8[%c0_18, %c0_19], %27 {strides = array<i32>} : memref<16x128xf32, #tpu.memory_space<vmem>>, vector<16x128xf32>,
    return
  }
  func.func @transform_0(%arg0: i32) -> (i32, i32) {
    %c0_i32 = arith.constant 0 : i32
    %c0_i32_0 = arith.constant 0 : i32
    return %arg0, %c0_i32 : i32, i32
  }
  func.func @transform_1(%arg0: i32) -> (i32, i32) {
    %c0_i32 = arith.constant 0 : i32
    %c0_i32_0 = arith.constant 0 : i32
    %c0_i32_1 = arith.constant 0 : i32
    return %c0_i32, %c0_i32_0 : i32, i32
  }
  func.func @transform_2(%arg0: i32) -> (i32, i32) {
    %c0_i32 = arith.constant 0 : i32
    %c0_i32_0 = arith.constant 0 : i32
    %c0_i32_1 = arith.constant 0 : i32
    return %c0_i32, %c0_i32_0 : i32, i32
  }
  func.func @transform_3(%arg0: i32) -> (i32, i32) {
    %c0_i32 = arith.constant 0 : i32
    %c0_i32_0 = arith.constant 0 : i32
    %c0_i32_1 = arith.constant 0 : i32
    return %c0_i32, %c0_i32_0 : i32, i32
  }
  func.func @transform_4(%arg0: i32) -> (i32, i32) {
    %c0_i32 = arith.constant 0 : i32
    %c0_i32_0 = arith.constant 0 : i32
    %c0_i32_1 = arith.constant 0 : i32
    return %c0_i32, %c0_i32_0 : i32, i32
  }
  func.func @transform_5(%arg0: i32) -> (i32, i32) {
    %c0_i32 = arith.constant 0 : i32
    %c0_i32_0 = arith.constant 0 : i32
    %c0_i32_1 = arith.constant 0 : i32
    return %c0_i32, %c0_i32_0 : i32, i32
  }
  func.func @transform_6(%arg0: i32) -> (i32, i32) {
    %c0_i32 = arith.constant 0 : i32
    %c0_i32_0 = arith.constant 0 : i32
    %c0_i32_1 = arith.constant 0 : i32
    return %c0_i32, %c0_i32_0 : i32, i32
  }
  func.func @transform_7(%arg0: i32) -> (i32, i32) {
    %c0_i32 = arith.constant 0 : i32
    %c0_i32_0 = arith.constant 0 : i32
    return %arg0, %c0_i32 : i32, i32
  }
}

</mosaic_0001>

<llo_original>
// kernel: tpu_custom_call.1
$region0: #{tpu_custom_call.1}
  #allocation0 [shape = 'u32[]', space=smem, size = 0x4, offset = 0x4, fixed_abs, tag = 'smem constant byte address 0x4 - core index']
  #allocation1 [shape = 'u32[144,128]{1,0:T(1,128)}', space=vmem, size = 0x12000, scoped, tag = 'internal scratch']
  %s0 = inlined_call_operand.hbm [shape: f32[16,32], index: 0, kind: input, shape index: {}]
  %s1 = inlined_call_operand.hbm [shape: bf16[32,128], index: 1, kind: input, shape index: {}]
  %s2 = inlined_call_operand.vmem [shape: f32[1,128], index: 2, kind: input, shape index: {}]
  %s3 = inlined_call_operand.hbm [shape: bf16[128,128], index: 3, kind: input, shape index: {}]
  %s4 = inlined_call_operand.vmem [shape: f32[1,128], index: 4, kind: input, shape index: {}]
  %s5 = inlined_call_operand.hbm [shape: bf16[128,128], index: 5, kind: input, shape index: {}]
  %s6 = inlined_call_operand.vmem [shape: f32[1,128], index: 6, kind: input, shape index: {}]
  %s7 = inlined_call_operand.hbm [shape: f32[16,128], index: 7, kind: output, shape index: {}]
  %s8 = sld [smem:[#allocation0]]
  $region54: #{tpu_custom_call.1} parent=0
    _
  %s10 = ssub.s32 1, %s8
  %s11 = scalar_select 0, %s10, %s8
  $region1: #{tpu_custom_call.1} parent=0
    #allocation2 [shape = 'u8[8192]{0}', space=vmem, size = 0x2000, scoped, tag = 'input window, operand 0, single buffered']
    #allocation3 [shape = 's32[1]{0}', space=sflag, size = 0x4, scoped, tag = 'scoped memory for tpu_custom_call.1']
    #allocation4 [shape = 's32[1]{0}', space=sflag, size = 0x4, scoped, tag = 'scoped memory for tpu_custom_call.1']
    #allocation5 [shape = 'u8[8192]{0}', space=vmem, size = 0x2000, scoped, tag = 'input window, operand 1, single buffered']
    #allocation6 [shape = 's32[1]{0}', space=sflag, size = 0x4, scoped, tag = 'scoped memory for tpu_custom_call.1']
    #allocation7 [shape = 'u8[32768]{0}', space=vmem, size = 0x8000, scoped, tag = 'input window, operand 3, single buffered']
    #allocation8 [shape = 'u8[32768]{0}', space=vmem, size = 0x8000, scoped, tag = 'input window, operand 5, single buffered']
    #allocation9 [shape = 's32[1]{0}', space=sflag, size = 0x4, scoped, tag = 'scoped memory for tpu_custom_call.1']
    #allocation10 [shape = 'u8[8192]{0}', space=vmem, size = 0x2000, scoped, tag = 'output window, operand 0, single buffered']
    %12 = vsyncpa [#allocation3], 0
    %13 = vsyncpa [#allocation6], 0
    %14 = vsyncpa [#allocation9], 0
    %15 = vsyncpa [#allocation4], 0
    // Predicated region
    $region2: #{tpu_custom_call.1} parent=1 // pred_check
      _
    $region3: #{tpu_custom_call.1} parent=1 // pred_check_branch
      %17 = sbr.rel (0) target = $region5
    $region4: #{tpu_custom_call.1} parent=1 // pred_region
      %s19 = ssub.s32 256, 256
      %20 = vsyncadd [#allocation3], %s19
      %s21 = sshll.u32 [#allocation2], 4
      %s22 = int_to_ptr.vmem [resolvable:$true] %s21
      %27 = dma.hbm_to_vmem [thread:$0]  %s0, 256, %s22, [#allocation3], 128, 128, 8
    $region5: #{tpu_custom_call.1} parent=1 // pred_fallthru
      _
    // Predicated region
    $region6: #{tpu_custom_call.1} parent=1 // pred_check
      _
    $region7: #{tpu_custom_call.1} parent=1 // pred_check_branch
      %29 = sbr.rel (0) target = $region9
    $region8: #{tpu_custom_call.1} parent=1 // pred_region
      %s31 = ssub.s32 256, 256
      %32 = vsyncadd [#allocation6], %s31
      %s33 = sshll.u32 [#allocation5], 4
      %s34 = int_to_ptr.vmem [resolvable:$true] %s33
      %39 = dma.hbm_to_vmem [thread:$0]  %s1, 256, %s34, [#allocation6], 64, 64, 4
    $region9: #{tpu_custom_call.1} parent=1 // pred_fallthru
      _
    // Predicated region
    $region10: #{tpu_custom_call.1} parent=1 // pred_check
      _
    $region11: #{tpu_custom_call.1} parent=1 // pred_check_branch
      %41 = sbr.rel (0) target = $region13
    $region12: #{tpu_custom_call.1} parent=1 // pred_region
      _
    $region13: #{tpu_custom_call.1} parent=1 // pred_fallthru
      _
    // Predicated region
    $region14: #{tpu_custom_call.1} parent=1 // pred_check
      _
    $region15: #{tpu_custom_call.1} parent=1 // pred_check_branch
      %43 = sbr.rel (0) target = $region17
    $region16: #{tpu_custom_call.1} parent=1 // pred_region
      %s45 = ssub.s32 1024, 1024
      %46 = vsyncadd [#allocation6], %s45
      %s47 = sshll.u32 [#allocation7], 4
      %s48 = int_to_ptr.vmem [resolvable:$true] %s47
      %53 = dma.hbm_to_vmem [thread:$0]  %s3, 1024, %s48, [#allocation6], 64, 64, 4
    $region17: #{tpu_custom_call.1} parent=1 // pred_fallthru
      _
    // Predicated region
    $region18: #{tpu_custom_call.1} parent=1 // pred_check
      _
    $region19: #{tpu_custom_call.1} parent=1 // pred_check_branch
      %55 = sbr.rel (0) target = $region21
    $region20: #{tpu_custom_call.1} parent=1 // pred_region
      _
    $region21: #{tpu_custom_call.1} parent=1 // pred_fallthru
      _
    // Predicated region
    $region22: #{tpu_custom_call.1} parent=1 // pred_check
      _
    $region23: #{tpu_custom_call.1} parent=1 // pred_check_branch
      %57 = sbr.rel (0) target = $region25
    $region24: #{tpu_custom_call.1} parent=1 // pred_region
      %s59 = ssub.s32 1024, 1024
      %60 = vsyncadd [#allocation9], %s59
      %s61 = sshll.u32 [#allocation8], 4
      %s62 = int_to_ptr.vmem [resolvable:$true] %s61
      %67 = dma.hbm_to_vmem [thread:$0]  %s5, 1024, %s62, [#allocation9], 64, 64, 4
    $region25: #{tpu_custom_call.1} parent=1 // pred_fallthru
      _
    // Predicated region
    $region26: #{tpu_custom_call.1} parent=1 // pred_check
      _
    $region27: #{tpu_custom_call.1} parent=1 // pred_check_branch
      %69 = sbr.rel (0) target = $region29
    $region28: #{tpu_custom_call.1} parent=1 // pred_region
      _
    $region29: #{tpu_custom_call.1} parent=1 // pred_fallthru
      _
    // Predicated region
    $region30: #{tpu_custom_call.1} parent=1 // pred_check
      _
    $region31: #{tpu_custom_call.1} parent=1 // pred_check_branch
      %71 = sbr.rel (0) target = $region33
    $region32: #{tpu_custom_call.1} parent=1 // pred_region
      %72 = dma.done [#allocation3], 256
    $region33: #{tpu_custom_call.1} parent=1 // pred_fallthru
      _
    // Predicated region
    $region34: #{tpu_custom_call.1} parent=1 // pred_check
      _
    $region35: #{tpu_custom_call.1} parent=1 // pred_check_branch
      %74 = sbr.rel (0) target = $region37
    $region36: #{tpu_custom_call.1} parent=1 // pred_region
      %75 = dma.done [#allocation6], 256
    $region37: #{tpu_custom_call.1} parent=1 // pred_fallthru
      _
    // Predicated region
    $region38: #{tpu_custom_call.1} parent=1 // pred_check
      _
    $region39: #{tpu_custom_call.1} parent=1 // pred_check_branch
      %77 = sbr.rel (0) target = $region41
    $region40: #{tpu_custom_call.1} parent=1 // pred_region
      %78 = dma.done [#allocation6], 1024
    $region41: #{tpu_custom_call.1} parent=1 // pred_fallthru
      _
    // Predicated region
    $region42: #{tpu_custom_call.1} parent=1 // pred_check
      _
    $region43: #{tpu_custom_call.1} parent=1 // pred_check_branch
      %80 = sbr.rel (0) target = $region45
    $region44: #{tpu_custom_call.1} parent=1 // pred_region
      %81 = dma.done [#allocation9], 1024
    $region45: #{tpu_custom_call.1} parent=1 // pred_fallthru
      _
    %v83 = vld [vmem:[#allocation2] sm:$0xff]
    %v84 = vld [vmem:[#allocation2 + $0x8] sm:$0xff]
    %v85 = vpack.c.bf16 %v84, %v83
    %v86 = vld [vmem:[#allocation5] sm:$0xf]
    %v87 = vld [vmem:[#allocation5 + $0x4] sm:$0xf]
    %v88 = vld [vmem:[#allocation5 + $0x8] sm:$0xf]
    %v89 = vld [vmem:[#allocation5 + $0xc] sm:$0xf]
    %v90 = vld [vmem:[%s2] sm:$0x1]
    %v92 = vlaneseq
    %v93 = vshrl.u32 %v92, 7
    %v94 = vsub.s32 0, %v93
    %v95 = vrot.slane %v90, %v94
    %v101 = vunpack.c.l.b16 %v86
    %v102 = vunpack.c.l.b16 %v87
    %v103 = vunpack.c.l.b16 %v88
    %v104 = vunpack.c.l.b16 %v89
    %v105 = vpack.c.b16 %v102, %v101
    %v106 = vpack.c.b16 %v104, %v103
    %vm109 = vcmask 261120
    %v111 = vsel %vm109, %v85, 0
    %113 = vmatprep.subr.bf16.mxu0 0
    %114 = vmatpush1.bf16.msra.mxu0 %v105
    %115 = vmatprep.subr.bf16.mxu0 0
    %116 = vmatpush1.bf16.msra.mxu0 %v106
    %117 = vmatprep.subr.bf16.mxu0 0
    %118 = vmatpush1.bf16.msra.mxu0 0
    %119 = vmatprep.subr.bf16.mxu0 0
    %120 = vmatpush1.bf16.msra.mxu0 0
    %121 = vmatprep.subr.bf16.mxu0 0
    %122 = vmatpush1.bf16.msra.mxu0 0
    %123 = vmatprep.subr.bf16.mxu0 0
    %124 = vmatpush1.bf16.msra.mxu0 0
    %125 = vmatprep.subr.bf16.mxu0 0
    %126 = vmatpush1.bf16.msra.mxu0 0
    %127 = vmatprep.subr.bf16.mxu0 0
    %128 = vmatpush1.bf16.msra.mxu0 0
    %129 = vmatprep.subr.bf16.mxu0 0
    %130 = vmatpush1.bf16.msra.mxu0 0
    %131 = vmatprep.subr.bf16.mxu0 0
    %132 = vmatpush1.bf16.msra.mxu0 0
    %133 = vmatprep.subr.bf16.mxu0 0
    %134 = vmatpush1.bf16.msra.mxu0 0
    %135 = vmatprep.subr.bf16.mxu0 0
    %136 = vmatpush1.bf16.msra.mxu0 0
    %137 = vmatprep.subr.bf16.mxu0 0
    %138 = vmatpush1.bf16.msra.mxu0 0
    %139 = vmatprep.subr.bf16.mxu0 0
    %140 = vmatpush1.bf16.msra.mxu0 0
    %141 = vmatprep.subr.bf16.mxu0 0
    %142 = vmatpush1.bf16.msra.mxu0 0
    %143 = vmatprep.subr.bf16.mxu0 0
    %144 = vmatpush1.bf16.msra.mxu0 0
    %145 = vmatprep.mubr.bf16.mxu0 0
    %146 = vmatmul.mubr.bf16.gmra.mrb[0].mxu0 %v111
    %v147 = vpop.f32.mrb[0].mxu0
    %v148 = vadd.f32 %v95, %v147
    %v149 = vpop.f32.mrb[0].mxu0
    %v150 = vpop.f32.mrb[0].mxu0
    %v151 = vadd.f32 %v95, %v150
    %v152 = vpop.f32.mrb[0].mxu0
    %153 = vdwg.mxu0
    %v154 = vmul.f32 %v148, 0.01
    %v155 = vmul.f32 %v151, 0.01
    %v156 = vmax.f32 %v148, %v154
    %v157 = vmax.f32 %v151, %v155
    %v158 = vpack.c.bf16 %v157, %v156
    %v159 = vld [vmem:[#allocation7] sm:$0xf]
    %v160 = vld [vmem:[#allocation7 + $0x4] sm:$0xf]
    %v161 = vld [vmem:[#allocation7 + $0x8] sm:$0xf]
    %v162 = vld [vmem:[#allocation7 + $0xc] sm:$0xf]
    %v163 = vld [vmem:[#allocation7 + $0x10] sm:$0xf]
    %v164 = vld [vmem:[#allocation7 + $0x14] sm:$0xf]
    %v165 = vld [vmem:[#allocation7 + $0x18] sm:$0xf]
    %v166 = vld [vmem:[#allocation7 + $0x1c] sm:$0xf]
    %v167 = vld [vmem:[#allocation7 + $0x20] sm:$0xf]
    %v168 = vld [vmem:[#allocation7 + $0x24] sm:$0xf]
    %v169 = vld [vmem:[#allocation7 + $0x28] sm:$0xf]
    %v170 = vld [vmem:[#allocation7 + $0x2c] sm:$0xf]
    %v171 = vld [vmem:[#allocation7 + $0x30] sm:$0xf]
    %v172 = vld [vmem:[#allocation7 + $0x34] sm:$0xf]
    %v173 = vld [vmem:[#allocation7 + $0x38] sm:$0xf]
    %v174 = vld [vmem:[#allocation7 + $0x3c] sm:$0xf]
    %v175 = vld [vmem:[%s4] sm:$0x1]
    %v177 = vlaneseq
    %v178 = vshrl.u32 %v177, 7
    %v179 = vsub.s32 0, %v178
    %v180 = vrot.slane %v175, %v179
    %v198 = vunpack.c.l.b16 %v159
    %v199 = vunpack.c.l.b16 %v160
    %v200 = vunpack.c.l.b16 %v161
    %v201 = vunpack.c.l.b16 %v162
    %v202 = vunpack.c.l.b16 %v163
    %v203 = vunpack.c.l.b16 %v164
    %v204 = vunpack.c.l.b16 %v165
    %v205 = vunpack.c.l.b16 %v166
    %v206 = vunpack.c.l.b16 %v167
    %v207 = vunpack.c.l.b16 %v168
    %v208 = vunpack.c.l.b16 %v169
    %v209 = vunpack.c.l.b16 %v170
    %v210 = vunpack.c.l.b16 %v171
    %v211 = vunpack.c.l.b16 %v172
    %v212 = vunpack.c.l.b16 %v173
    %v213 = vunpack.c.l.b16 %v174
    %v214 = vpack.c.b16 %v199, %v198
    %v215 = vpack.c.b16 %v201, %v200
    %v216 = vpack.c.b16 %v203, %v202
    %v217 = vpack.c.b16 %v205, %v204
    %v218 = vpack.c.b16 %v207, %v206
    %v219 = vpack.c.b16 %v209, %v208
    %v220 = vpack.c.b16 %v211, %v210
    %v221 = vpack.c.b16 %v213, %v212
    %230 = vmatprep.subr.bf16.mxu0 0
    %231 = vmatpush1.bf16.msra.mxu0 %v214
    %232 = vmatprep.subr.bf16.mxu0 0
    %233 = vmatpush1.bf16.msra.mxu0 %v215
    %234 = vmatprep.subr.bf16.mxu0 0
    %235 = vmatpush1.bf16.msra.mxu0 %v216
    %236 = vmatprep.subr.bf16.mxu0 0
    %237 = vmatpush1.bf16.msra.mxu0 %v217
    %238 = vmatprep.subr.bf16.mxu0 0
    %239 = vmatpush1.bf16.msra.mxu0 %v218
    %240 = vmatprep.subr.bf16.mxu0 0
    %241 = vmatpush1.bf16.msra.mxu0 %v219
    %242 = vmatprep.subr.bf16.mxu0 0
    %243 = vmatpush1.bf16.msra.mxu0 %v220
    %244 = vmatprep.subr.bf16.mxu0 0
    %245 = vmatpush1.bf16.msra.mxu0 %v221
    %246 = vmatprep.subr.bf16.mxu0 0
    %247 = vmatpush1.bf16.msra.mxu0 0
    %248 = vmatprep.subr.bf16.mxu0 0
    %249 = vmatpush1.bf16.msra.mxu0 0
    %250 = vmatprep.subr.bf16.mxu0 0
    %251 = vmatpush1.bf16.msra.mxu0 0
    %252 = vmatprep.subr.bf16.mxu0 0
    %253 = vmatpush1.bf16.msra.mxu0 0
    %254 = vmatprep.subr.bf16.mxu0 0
    %255 = vmatpush1.bf16.msra.mxu0 0
    %256 = vmatprep.subr.bf16.mxu0 0
    %257 = vmatpush1.bf16.msra.mxu0 0
    %258 = vmatprep.subr.bf16.mxu0 0
    %259 = vmatpush1.bf16.msra.mxu0 0
    %260 = vmatprep.subr.bf16.mxu0 0
    %261 = vmatpush1.bf16.msra.mxu0 0
    %262 = vmatprep.mubr.bf16.mxu0 0
    %263 = vmatmul.mubr.bf16.gmra.mrb[0].mxu0 %v158
    %v264 = vpop.f32.mrb[0].mxu0
    %v265 = vadd.f32 %v180, %v264
    %v266 = vpop.f32.mrb[0].mxu0
    %v267 = vpop.f32.mrb[0].mxu0
    %v268 = vadd.f32 %v180, %v267
    %v269 = vpop.f32.mrb[0].mxu0
    %270 = vdwg.mxu0
    %v271 = vmul.f32 %v265, 0.01
    %v272 = vmul.f32 %v268, 0.01
    %v273 = vmax.f32 %v265, %v271
    %v274 = vmax.f32 %v268, %v272
    %v275 = vpack.c.bf16 %v274, %v273
    %v276 = vld [vmem:[#allocation8] sm:$0xf]
    %v277 = vld [vmem:[#allocation8 + $0x4] sm:$0xf]
    %v278 = vld [vmem:[#allocation8 + $0x8] sm:$0xf]
    %v279 = vld [vmem:[#allocation8 + $0xc] sm:$0xf]
    %v280 = vld [vmem:[#allocation8 + $0x10] sm:$0xf]
    %v281 = vld [vmem:[#allocation8 + $0x14] sm:$0xf]
    %v282 = vld [vmem:[#allocation8 + $0x18] sm:$0xf]
    %v283 = vld [vmem:[#allocation8 + $0x1c] sm:$0xf]
    %v284 = vld [vmem:[#allocation8 + $0x20] sm:$0xf]
    %v285 = vld [vmem:[#allocation8 + $0x24] sm:$0xf]
    %v286 = vld [vmem:[#allocation8 + $0x28] sm:$0xf]
    %v287 = vld [vmem:[#allocation8 + $0x2c] sm:$0xf]
    %v288 = vld [vmem:[#allocation8 + $0x30] sm:$0xf]
    %v289 = vld [vmem:[#allocation8 + $0x34] sm:$0xf]
    %v290 = vld [vmem:[#allocation8 + $0x38] sm:$0xf]
    %v291 = vld [vmem:[#allocation8 + $0x3c] sm:$0xf]
    %v292 = vld [vmem:[%s6] sm:$0x1]
    %v294 = vlaneseq
    %v295 = vshrl.u32 %v294, 7
    %v296 = vsub.s32 0, %v295
    %v297 = vrot.slane %v292, %v296
    %v315 = vunpack.c.l.b16 %v276
    %v316 = vunpack.c.l.b16 %v277
    %v317 = vunpack.c.l.b16 %v278
    %v318 = vunpack.c.l.b16 %v279
    %v319 = vunpack.c.l.b16 %v280
    %v320 = vunpack.c.l.b16 %v281
    %v321 = vunpack.c.l.b16 %v282
    %v322 = vunpack.c.l.b16 %v283
    %v323 = vunpack.c.l.b16 %v284
    %v324 = vunpack.c.l.b16 %v285
    %v325 = vunpack.c.l.b16 %v286
    %v326 = vunpack.c.l.b16 %v287
    %v327 = vunpack.c.l.b16 %v288
    %v328 = vunpack.c.l.b16 %v289
    %v329 = vunpack.c.l.b16 %v290
    %v330 = vunpack.c.l.b16 %v291
    %v331 = vpack.c.b16 %v316, %v315
    %v332 = vpack.c.b16 %v318, %v317
    %v333 = vpack.c.b16 %v320, %v319
    %v334 = vpack.c.b16 %v322, %v321
    %v335 = vpack.c.b16 %v324, %v323
    %v336 = vpack.c.b16 %v326, %v325
    %v337 = vpack.c.b16 %v328, %v327
    %v338 = vpack.c.b16 %v330, %v329
    %347 = vmatprep.subr.bf16.mxu0 0
    %348 = vmatpush1.bf16.msra.mxu0 %v331
    %349 = vmatprep.subr.bf16.mxu0 0
    %350 = vmatpush1.bf16.msra.mxu0 %v332
    %351 = vmatprep.subr.bf16.mxu0 0
    %352 = vmatpush1.bf16.msra.mxu0 %v333
    %353 = vmatprep.subr.bf16.mxu0 0
    %354 = vmatpush1.bf16.msra.mxu0 %v334
    %355 = vmatprep.subr.bf16.mxu0 0
    %356 = vmatpush1.bf16.msra.mxu0 %v335
    %357 = vmatprep.subr.bf16.mxu0 0
    %358 = vmatpush1.bf16.msra.mxu0 %v336
    %359 = vmatprep.subr.bf16.mxu0 0
    %360 = vmatpush1.bf16.msra.mxu0 %v337
    %361 = vmatprep.subr.bf16.mxu0 0
    %362 = vmatpush1.bf16.msra.mxu0 %v338
    %363 = vmatprep.subr.bf16.mxu0 0
    %364 = vmatpush1.bf16.msra.mxu0 0
    %365 = vmatprep.subr.bf16.mxu0 0
    %366 = vmatpush1.bf16.msra.mxu0 0
    %367 = vmatprep.subr.bf16.mxu0 0
    %368 = vmatpush1.bf16.msra.mxu0 0
    %369 = vmatprep.subr.bf16.mxu0 0
    %370 = vmatpush1.bf16.msra.mxu0 0
    %371 = vmatprep.subr.bf16.mxu0 0
    %372 = vmatpush1.bf16.msra.mxu0 0
    %373 = vmatprep.subr.bf16.mxu0 0
    %374 = vmatpush1.bf16.msra.mxu0 0
    %375 = vmatprep.subr.bf16.mxu0 0
    %376 = vmatpush1.bf16.msra.mxu0 0
    %377 = vmatprep.subr.bf16.mxu0 0
    %378 = vmatpush1.bf16.msra.mxu0 0
    %379 = vmatprep.mubr.bf16.mxu0 0
    %380 = vmatmul.mubr.bf16.gmra.mrb[0].mxu0 %v275
    %v381 = vpop.f32.mrb[0].mxu0
    %v382 = vadd.f32 %v297, %v381
    %v383 = vpop.f32.mrb[0].mxu0
    %v384 = vpop.f32.mrb[0].mxu0
    %v385 = vadd.f32 %v297, %v384
    %v386 = vpop.f32.mrb[0].mxu0
    %387 = vdwg.mxu0
    %v388 = vmul.f32 %v382, 0.01
    %v389 = vmul.f32 %v385, 0.01
    %v390 = vmax.f32 %v382, %v388
    %v391 = vmax.f32 %v385, %v389
    %392 = vst [vmem:[#allocation10] sm:$0xff] %v390
    %393 = vst [vmem:[#allocation10 + $0x8] sm:$0xff] %v391
    // Predicated region
    $region46: #{tpu_custom_call.1} parent=1 // pred_check
      _
    $region47: #{tpu_custom_call.1} parent=1 // pred_check_branch
      %395 = sbr.rel (0) target = $region49
    $region48: #{tpu_custom_call.1} parent=1 // pred_region
      %s397 = ssub.s32 256, 256
      %398 = vsyncadd [#allocation4], %s397
      %s399 = sshll.u32 [#allocation10], 4
      %s400 = int_to_ptr.vmem [resolvable:$true] %s399
      %405 = dma.vmem_to_hbm [thread:$0]  %s400, 256, %s7, [#allocation4], 128, 128, 8
    $region49: #{tpu_custom_call.1} parent=1 // pred_fallthru
      _
    // Predicated region
    $region50: #{tpu_custom_call.1} parent=1 // pred_check
      _
    $region51: #{tpu_custom_call.1} parent=1 // pred_check_branch
      %407 = sbr.rel (0) target = $region53
    $region52: #{tpu_custom_call.1} parent=1 // pred_region
      %408 = dma.done [#allocation4], 256
    $region53: #{tpu_custom_call.1} parent=1 // pred_fallthru
      _
    %409 = vsyncpa [#allocation3], 1
    %410 = vsyncpa [#allocation6], 1
    %411 = vsyncpa [#allocation9], 1
    %412 = vsyncpa [#allocation4], 1

</llo_original>
